<compile_context>
chip_gen: v5e
topology: v5e:2x2
jax: 0.10.0
libtpu: 0.0.40
codegen_flags: <defaults>
</compile_context>

<pallas_src>
import jax
import jax.numpy as jnp
from jax.experimental import pallas as pl
from jax.experimental.pallas import tpu as pltpu


def qnet_kernel(x_ref, w1_ref, b1_ref, w2_ref, b2_ref,
                w3_ref, b3_ref, w4_ref, b4_ref, out_ref):
    """One batch tile: 4 feature-major matmuls + biases + 3 ReLUs."""
    mm_dtype = w1_ref.dtype  # matmul operand dtype (f32 or bf16)

    # x_ref: (state_size, TB) -- batch fills the 128-wide lane axis.
    h = jnp.dot(w1_ref[...], x_ref[...],
                preferred_element_type=jnp.float32) + b1_ref[...]
    h = jnp.maximum(h, 0.0)

    h = jnp.dot(w2_ref[...], h.astype(mm_dtype),
                preferred_element_type=jnp.float32) + b2_ref[...]
    h = jnp.maximum(h, 0.0)

    h = jnp.dot(w3_ref[...], h.astype(mm_dtype),
                preferred_element_type=jnp.float32) + b3_ref[...]
    h = jnp.maximum(h, 0.0)

    q = jnp.dot(w4_ref[...], h.astype(mm_dtype),
                preferred_element_type=jnp.float32) + b4_ref[...]
    out_ref[...] = q.astype(out_ref.dtype)


def qnetwork_forward(state, params, *, block_b=512, matmul_dtype=jnp.float32):
    """state: (B, state_size) float32.  params: name -> (W (out,in), b (out,1))."""
    w1, b1 = params["fc1"]
    w2, b2 = params["fc2"]
    w3, b3 = params["fc3"]
    w4, b4 = params["fc4"]

    B, state_size = state.shape
    h1, h2, h3 = w1.shape[0], w2.shape[0], w3.shape[0]
    action_size = w4.shape[0]

    mm = jnp.dtype(matmul_dtype)
    w1c, w2c, w3c, w4c = (w.astype(mm) for w in (w1, w2, w3, w4))

    # Feature-major input so batch lands in the lane (last) dimension.
    x_t = state.T.astype(mm)                       # (state_size, B)

    # Batch tiling: only tile when it pays off; pad B up to a tile multiple.
    if B >= 2 * block_b:
        tb = block_b
        b_pad = pl.cdiv(B, tb) * tb
        if b_pad != B:
            x_t = jnp.pad(x_t, ((0, 0), (0, b_pad - B)))
    else:
        tb = B
        b_pad = B
    grid = (b_pad // tb,)

    vmem = pltpu.MemorySpace.VMEM

    def resident(shape):
        # Whole array, same block index every grid step -> stays VMEM-resident.
        return pl.BlockSpec(shape, lambda i: (0,) * len(shape), memory_space=vmem)

    in_specs = [
        pl.BlockSpec((state_size, tb), lambda i: (0, i), memory_space=vmem),
        resident(w1c.shape), resident(b1.shape),
        resident(w2c.shape), resident(b2.shape),
        resident(w3c.shape), resident(b3.shape),
        resident(w4c.shape), resident(b4.shape),
    ]
    out_specs = pl.BlockSpec((action_size, tb), lambda i: (0, i),
                             memory_space=vmem)

    flops = 2 * B * (state_size * h1 + h1 * h2 + h2 * h3 + h3 * action_size)
    weight_bytes = sum(int(a.size) * a.dtype.itemsize
                       for a in (w1c, b1, w2c, b2, w3c, b3, w4c, b4))
    bytes_accessed = (int(x_t.size) * x_t.dtype.itemsize
                      + b_pad * action_size * 4 + weight_bytes)

    out_t = pl.pallas_call(
        qnet_kernel,
        out_shape=jax.ShapeDtypeStruct((action_size, b_pad), jnp.float32),
        grid=grid,
        in_specs=in_specs,
        out_specs=out_specs,
        compiler_params=pltpu.CompilerParams(
            dimension_semantics=("parallel",)),
        cost_estimate=pl.CostEstimate(
            flops=int(flops), transcendentals=0,
            bytes_accessed=int(bytes_accessed)),
    )(x_t, w1c, b1, w2c, b2, w3c, b3, w4c, b4)

    # Back to the PyTorch convention: (B, action_size).
    return out_t[:, :B].T


def init_linear(key, fan_in, fan_out):
    """PyTorch nn.Linear default init: U(-1/sqrt(fan_in), 1/sqrt(fan_in))."""
    kw, kb = jax.random.split(key)
    bound = 1.0 / float(fan_in) ** 0.5
    # Stored (out, in) so the kernel computes W @ x (feature-major).
    w = jax.random.uniform(kw, (fan_out, fan_in), jnp.float32, -bound, bound)
    b = jax.random.uniform(kb, (fan_out, 1), jnp.float32, -bound, bound)
    return w, b


def init_params(key, state_size, action_size, hidden=128):
    k1, k2, k3, k4 = jax.random.split(key, 4)
    return {
        "fc1": init_linear(k1, state_size, hidden),
        "fc2": init_linear(k2, hidden, hidden // 2),
        "fc3": init_linear(k3, hidden // 2, hidden // 4),
        "fc4": init_linear(k4, hidden // 4, action_size),
    }


def ref_forward(state, params, matmul_dtype=jnp.float32):
    """Pure-JAX reference mirroring the kernel math (operand dtype, f32 accum)."""
    mm = jnp.dtype(matmul_dtype)
    x = state.astype(mm)
    for name in ("fc1", "fc2", "fc3"):
        w, b = params[name]
        h = jnp.dot(x, w.T.astype(mm),
                    preferred_element_type=jnp.float32) + b[:, 0]
        x = jnp.maximum(h, 0.0).astype(mm)
    w, b = params["fc4"]
    return jnp.dot(x, w.T.astype(mm),
                   preferred_element_type=jnp.float32) + b[:, 0]


if __name__ == "__main__":
    key = jax.random.PRNGKey(0)
    kp, kx, kx2 = jax.random.split(key, 3)

    # --- Small shapes consistent with the module (single-block path, f32). ---
    batch, state_size, action_size, hidden = 8, 8, 4, 32
    params = init_params(kp, state_size, action_size, hidden)
    state = jax.random.normal(kx, (batch, state_size), jnp.float32)

    q = jax.block_until_ready(qnetwork_forward(state, params))
    expected = ref_forward(state, params)
    assert q.shape == (batch, action_size)
    assert jnp.allclose(q, expected, atol=1e-4, rtol=1e-4), float(
        jnp.max(jnp.abs(q - expected)))

    # --- Larger batch: exercises the tiled "parallel" grid + bf16 operands. ---
    batch2, hidden2 = 1024, 128          # module-default hidden
    params2 = init_params(kp, state_size, action_size, hidden2)
    state2 = jax.random.normal(kx2, (batch2, state_size), jnp.float32)

    q2 = jax.block_until_ready(
        qnetwork_forward(state2, params2, block_b=512,
                         matmul_dtype=jnp.bfloat16))
    expected2 = ref_forward(state2, params2, matmul_dtype=jnp.bfloat16)
    assert q2.shape == (batch2, action_size)
    assert jnp.allclose(q2, expected2, atol=1e-2, rtol=1e-2), float(
        jnp.max(jnp.abs(q2 - expected2)))

    print("KERNEL_OK")
</pallas_src>

<mosaic_0001>
module attributes {stable_mosaic.version = 11 : i64} {
  func.func @qnet_kernel(%arg0: i32, %arg1: memref<8x8xf32, #tpu.memory_space<vmem>>, %arg2: memref<32x8xf32, #tpu.memory_space<vmem>>, %arg3: memref<32x1xf32, #tpu.memory_space<vmem>>, %arg4: memref<16x32xf32, #tpu.memory_space<vmem>>, %arg5: memref<16x1xf32, #tpu.memory_space<vmem>>, %arg6: memref<8x16xf32, #tpu.memory_space<vmem>>, %arg7: memref<8x1xf32, #tpu.memory_space<vmem>>, %arg8: memref<4x8xf32, #tpu.memory_space<vmem>>, %arg9: memref<4x1xf32, #tpu.memory_space<vmem>>, %arg10: memref<4x8xf32, #tpu.memory_space<vmem>>) attributes {dimension_semantics = [#tpu.dimension_semantics<parallel>], iteration_bounds = array<i64: 1>, scalar_prefetch = 0 : i64, scratch_operands = 0 : i64, tpu.core_type = #tpu.core_type<tc>, window_params = [{transform_indices = @transform_0, window_bounds = array<i64: 8, 8>}, {pipeline_mode = #tpu.pipeline_mode<synchronous>, transform_indices = @transform_1, window_bounds = array<i64: 32, 8>}, {pipeline_mode = #tpu.pipeline_mode<synchronous>, transform_indices = @transform_2, window_bounds = array<i64: 32, 1>}, {pipeline_mode = #tpu.pipeline_mode<synchronous>, transform_indices = @transform_3, window_bounds = array<i64: 16, 32>}, {pipeline_mode = #tpu.pipeline_mode<synchronous>, transform_indices = @transform_4, window_bounds = array<i64: 16, 1>}, {pipeline_mode = #tpu.pipeline_mode<synchronous>, transform_indices = @transform_5, window_bounds = array<i64: 8, 16>}, {pipeline_mode = #tpu.pipeline_mode<synchronous>, transform_indices = @transform_6, window_bounds = array<i64: 8, 1>}, {pipeline_mode = #tpu.pipeline_mode<synchronous>, transform_indices = @transform_7, window_bounds = array<i64: 4, 8>}, {pipeline_mode = #tpu.pipeline_mode<synchronous>, transform_indices = @transform_8, window_bounds = array<i64: 4, 1>}, {transform_indices = @transform_9, window_bounds = array<i64: 4, 8>}]} {
    %c0 = arith.constant 0 : index
    %c0_0 = arith.constant 0 : index
    %0 = vector.load %arg2[%c0, %c0_0] : memref<32x8xf32, #tpu.memory_space<vmem>>, vector<32x8xf32>
    %c0_1 = arith.constant 0 : index
    %c0_2 = arith.constant 0 : index
    %1 = vector.load %arg1[%c0_1, %c0_2] : memref<8x8xf32, #tpu.memory_space<vmem>>, vector<8x8xf32>
    %cst = arith.constant dense<0.000000e+00> : vector<32x8xf32>
    %2 = tpu.matmul %0, %1, %cst {dimension_numbers = #tpu.dot_dimension_numbers<[1], [0], [0], [1], [0, 0, 1, 1], [], []>} : vector<32x8xf32>, vector<8x8xf32>, vector<32x8xf32> -> vector<32x8xf32>
    %c0_3 = arith.constant 0 : index
    %c0_4 = arith.constant 0 : index
    %3 = vector.load %arg3[%c0_3, %c0_4] : memref<32x1xf32, #tpu.memory_space<vmem>>, vector<32x1xf32>
    %4 = vector.broadcast %3 : vector<32x1xf32> to vector<32x8xf32>
    %5 = arith.addf %2, %4 : vector<32x8xf32>
    %cst_5 = arith.constant 0.000000e+00 : f32
    %6 = vector.broadcast %cst_5 : f32 to vector<32x8xf32>
    %7 = arith.maximumf %5, %6 : vector<32x8xf32>
    %c0_6 = arith.constant 0 : index
    %c0_7 = arith.constant 0 : index
    %8 = vector.load %arg4[%c0_6, %c0_7] : memref<16x32xf32, #tpu.memory_space<vmem>>, vector<16x32xf32>
    %cst_8 = arith.constant dense<0.000000e+00> : vector<16x8xf32>
    %9 = tpu.matmul %8, %7, %cst_8 {dimension_numbers = #tpu.dot_dimension_numbers<[1], [0], [0], [1], [0, 0, 1, 1], [], []>} : vector<16x32xf32>, vector<32x8xf32>, vector<16x8xf32> -> vector<16x8xf32>
    %c0_9 = arith.constant 0 : index
    %c0_10 = arith.constant 0 : index
    %10 = vector.load %arg5[%c0_9, %c0_10] : memref<16x1xf32, #tpu.memory_space<vmem>>, vector<16x1xf32>
    %11 = vector.broadcast %10 : vector<16x1xf32> to vector<16x8xf32>
    %12 = arith.addf %9, %11 : vector<16x8xf32>
    %cst_11 = arith.constant 0.000000e+00 : f32
    %13 = vector.broadcast %cst_11 : f32 to vector<16x8xf32>
    %14 = arith.maximumf %12, %13 : vector<16x8xf32>
    %c0_12 = arith.constant 0 : index
    %c0_13 = arith.constant 0 : index
    %15 = vector.load %arg6[%c0_12, %c0_13] : memref<8x16xf32, #tpu.memory_space<vmem>>, vector<8x16xf32>
    %cst_14 = arith.constant dense<0.000000e+00> : vector<8x8xf32>
    %16 = tpu.matmul %15, %14, %cst_14 {dimension_numbers = #tpu.dot_dimension_numbers<[1], [0], [0], [1], [0, 0, 1, 1], [], []>} : vector<8x16xf32>, vector<16x8xf32>, vector<8x8xf32> -> vector<8x8xf32>
    %c0_15 = arith.constant 0 : index
    %c0_16 = arith.constant 0 : index
    %17 = vector.load %arg7[%c0_15, %c0_16] : memref<8x1xf32, #tpu.memory_space<vmem>>, vector<8x1xf32>
    %18 = vector.broadcast %17 : vector<8x1xf32> to vector<8x8xf32>
    %19 = arith.addf %16, %18 : vector<8x8xf32>
    %cst_17 = arith.constant 0.000000e+00 : f32
    %20 = vector.broadcast %cst_17 : f32 to vector<8x8xf32>
    %21 = arith.maximumf %19, %20 : vector<8x8xf32>
    %c0_18 = arith.constant 0 : index
    %c0_19 = arith.constant 0 : index
    %22 = vector.load %arg8[%c0_18, %c0_19] : memref<4x8xf32, #tpu.memory_space<vmem>>, vector<4x8xf32>
    %cst_20 = arith.constant dense<0.000000e+00> : vector<4x8xf32>
    %23 = tpu.matmul %22, %21, %cst_20 {dimension_numbers = #tpu.dot_dimension_numbers<[1], [0], [0], [1], [0, 0, 1, 1], [], []>} : vector<4x8xf32>, vector<8x8xf32>, vector<4x8xf32> -> vector<4x8xf32>
    %c0_21 = arith.constant 0 : index
    %c0_22 = arith.constant 0 : index
    %24 = vector.load %arg9[%c0_21, %c0_22] : memref<4x1xf32, #tpu.memory_space<vmem>>, vector<4x1xf32>
    %25 = vector.broadcast %24 : vector<4x1xf32> to vector<4x8xf32>
    %26 = arith.addf %23, %25 : vector<4x8xf32>
    %c0_23 = arith.constant 0 : index
    %c0_24 = arith.constant 0 : index
    %27 = vector.load %arg10[%c0_23, %c0_24] : memref<4x8xf32, #tpu.memory_space<vmem>>, vector<4x8xf32>
    tpu.vector_store %arg10[%c0_23, %c0_24], %26 {strides = array<i32>} : memref<4x8xf32, #tpu.memory_space<vmem>>, vector<4x8xf32>,
    return
  }
  func.func @transform_0(%arg0: i32) -> (i32, i32) {
    %c0_i32 = arith.constant 0 : i32
    %c0_i32_0 = arith.constant 0 : i32
    return %c0_i32, %arg0 : i32, i32
  }
  func.func @transform_1(%arg0: i32) -> (i32, i32) {
    %c0_i32 = arith.constant 0 : i32
    %c0_i32_0 = arith.constant 0 : i32
    %c0_i32_1 = arith.constant 0 : i32
    return %c0_i32, %c0_i32_0 : i32, i32
  }
  func.func @transform_2(%arg0: i32) -> (i32, i32) {
    %c0_i32 = arith.constant 0 : i32
    %c0_i32_0 = arith.constant 0 : i32
    %c0_i32_1 = arith.constant 0 : i32
    return %c0_i32, %c0_i32_0 : i32, i32
  }
  func.func @transform_3(%arg0: i32) -> (i32, i32) {
    %c0_i32 = arith.constant 0 : i32
    %c0_i32_0 = arith.constant 0 : i32
    %c0_i32_1 = arith.constant 0 : i32
    return %c0_i32, %c0_i32_0 : i32, i32
  }
  func.func @transform_4(%arg0: i32) -> (i32, i32) {
    %c0_i32 = arith.constant 0 : i32
    %c0_i32_0 = arith.constant 0 : i32
    %c0_i32_1 = arith.constant 0 : i32
    return %c0_i32, %c0_i32_0 : i32, i32
  }
  func.func @transform_5(%arg0: i32) -> (i32, i32) {
    %c0_i32 = arith.constant 0 : i32
    %c0_i32_0 = arith.constant 0 : i32
    %c0_i32_1 = arith.constant 0 : i32
    return %c0_i32, %c0_i32_0 : i32, i32
  }
  func.func @transform_6(%arg0: i32) -> (i32, i32) {
    %c0_i32 = arith.constant 0 : i32
    %c0_i32_0 = arith.constant 0 : i32
    %c0_i32_1 = arith.constant 0 : i32
    return %c0_i32, %c0_i32_0 : i32, i32
  }
  func.func @transform_7(%arg0: i32) -> (i32, i32) {
    %c0_i32 = arith.constant 0 : i32
    %c0_i32_0 = arith.constant 0 : i32
    %c0_i32_1 = arith.constant 0 : i32
    return %c0_i32, %c0_i32_0 : i32, i32
  }
  func.func @transform_8(%arg0: i32) -> (i32, i32) {
    %c0_i32 = arith.constant 0 : i32
    %c0_i32_0 = arith.constant 0 : i32
    %c0_i32_1 = arith.constant 0 : i32
    return %c0_i32, %c0_i32_0 : i32, i32
  }
  func.func @transform_9(%arg0: i32) -> (i32, i32) {
    %c0_i32 = arith.constant 0 : i32
    %c0_i32_0 = arith.constant 0 : i32
    return %c0_i32, %arg0 : i32, i32
  }
}

</mosaic_0001>

<llo_original>
// kernel: tpu_custom_call.1
$region0: #{tpu_custom_call.1}
  #allocation0 [shape = 'u32[]', space=smem, size = 0x4, offset = 0x4, fixed_abs, tag = 'smem constant byte address 0x4 - core index']
  #allocation1 [shape = 'u32[72,128]{1,0:T(1,128)}', space=vmem, size = 0x9000, scoped, tag = 'internal scratch']
  %s0 = inlined_call_operand.vmem [shape: f32[8,8], index: 0, kind: input, shape index: {}]
  %s1 = inlined_call_operand.vmem [shape: f32[32,8], index: 1, kind: input, shape index: {}]
  %s2 = inlined_call_operand.vmem [shape: f32[32,1], index: 2, kind: input, shape index: {}]
  %s3 = inlined_call_operand.vmem [shape: f32[16,32], index: 3, kind: input, shape index: {}]
  %s4 = inlined_call_operand.vmem [shape: f32[16,1], index: 4, kind: input, shape index: {}]
  %s5 = inlined_call_operand.vmem [shape: f32[8,16], index: 5, kind: input, shape index: {}]
  %s6 = inlined_call_operand.vmem [shape: f32[8,1], index: 6, kind: input, shape index: {}]
  %s7 = inlined_call_operand.vmem [shape: f32[4,8], index: 7, kind: input, shape index: {}]
  %s8 = inlined_call_operand.vmem [shape: f32[4,1], index: 8, kind: input, shape index: {}]
  %s9 = inlined_call_operand.hbm [shape: f32[4,8], index: 9, kind: output, shape index: {}]
  %s10 = sld [smem:[#allocation0]]
  $region46: #{tpu_custom_call.1} parent=0
    _
  %s12 = ssub.s32 1, %s10
  %s13 = scalar_select 0, %s12, %s10
  $region1: #{tpu_custom_call.1} parent=0
    #allocation2 [shape = 'u8[2048]{0}', space=vmem, size = 0x800, scoped, tag = 'output window, operand 0, single buffered']
    #allocation3 [shape = 's32[1]{0}', space=sflag, size = 0x4, scoped, tag = 'scoped memory for tpu_custom_call.1']
    %14 = vsyncpa [#allocation3], 0
    // Predicated region
    $region2: #{tpu_custom_call.1} parent=1 // pred_check
      _
    $region3: #{tpu_custom_call.1} parent=1 // pred_check_branch
      %16 = sbr.rel (0) target = $region5
    $region4: #{tpu_custom_call.1} parent=1 // pred_region
      _
    $region5: #{tpu_custom_call.1} parent=1 // pred_fallthru
      _
    // Predicated region
    $region6: #{tpu_custom_call.1} parent=1 // pred_check
      _
    $region7: #{tpu_custom_call.1} parent=1 // pred_check_branch
      %18 = sbr.rel (0) target = $region9
    $region8: #{tpu_custom_call.1} parent=1 // pred_region
      _
    $region9: #{tpu_custom_call.1} parent=1 // pred_fallthru
      _
    // Predicated region
    $region10: #{tpu_custom_call.1} parent=1 // pred_check
      _
    $region11: #{tpu_custom_call.1} parent=1 // pred_check_branch
      %20 = sbr.rel (0) target = $region13
    $region12: #{tpu_custom_call.1} parent=1 // pred_region
      _
    $region13: #{tpu_custom_call.1} parent=1 // pred_fallthru
      _
    // Predicated region
    $region14: #{tpu_custom_call.1} parent=1 // pred_check
      _
    $region15: #{tpu_custom_call.1} parent=1 // pred_check_branch
      %22 = sbr.rel (0) target = $region17
    $region16: #{tpu_custom_call.1} parent=1 // pred_region
      _
    $region17: #{tpu_custom_call.1} parent=1 // pred_fallthru
      _
    // Predicated region
    $region18: #{tpu_custom_call.1} parent=1 // pred_check
      _
    $region19: #{tpu_custom_call.1} parent=1 // pred_check_branch
      %24 = sbr.rel (0) target = $region21
    $region20: #{tpu_custom_call.1} parent=1 // pred_region
      _
    $region21: #{tpu_custom_call.1} parent=1 // pred_fallthru
      _
    // Predicated region
    $region22: #{tpu_custom_call.1} parent=1 // pred_check
      _
    $region23: #{tpu_custom_call.1} parent=1 // pred_check_branch
      %26 = sbr.rel (0) target = $region25
    $region24: #{tpu_custom_call.1} parent=1 // pred_region
      _
    $region25: #{tpu_custom_call.1} parent=1 // pred_fallthru
      _
    // Predicated region
    $region26: #{tpu_custom_call.1} parent=1 // pred_check
      _
    $region27: #{tpu_custom_call.1} parent=1 // pred_check_branch
      %28 = sbr.rel (0) target = $region29
    $region28: #{tpu_custom_call.1} parent=1 // pred_region
      _
    $region29: #{tpu_custom_call.1} parent=1 // pred_fallthru
      _
    // Predicated region
    $region30: #{tpu_custom_call.1} parent=1 // pred_check
      _
    $region31: #{tpu_custom_call.1} parent=1 // pred_check_branch
      %30 = sbr.rel (0) target = $region33
    $region32: #{tpu_custom_call.1} parent=1 // pred_region
      _
    $region33: #{tpu_custom_call.1} parent=1 // pred_fallthru
      _
    // Predicated region
    $region34: #{tpu_custom_call.1} parent=1 // pred_check
      _
    $region35: #{tpu_custom_call.1} parent=1 // pred_check_branch
      %32 = sbr.rel (0) target = $region37
    $region36: #{tpu_custom_call.1} parent=1 // pred_region
      _
    $region37: #{tpu_custom_call.1} parent=1 // pred_fallthru
      _
    %v33 = vld [vmem:[%s1] sm:$0xff]
    %v34 = vld [vmem:[%s1 + $0x8] sm:$0xff]
    %v35 = vld [vmem:[%s1 + $0x10] sm:$0xff]
    %v36 = vld [vmem:[%s1 + $0x18] sm:$0xff]
    %v37 = vld [vmem:[%s0] sm:$0xff]
    %v38 = vld [vmem:[%s2] sm:$0xff]
    %v39 = vld [vmem:[%s2 + $0x8] sm:$0xff]
    %v40 = vld [vmem:[%s2 + $0x10] sm:$0xff]
    %v41 = vld [vmem:[%s2 + $0x18] sm:$0xff]
    %43 = vset.pattern.permute.xlu0 0
    %44 = vperm.xlu0 %43, %v38
    %v45 = vpop.permute.xlu0 %44
    %48 = vset.pattern.permute.xlu0 0
    %49 = vperm.xlu0 %48, %v39
    %v50 = vpop.permute.xlu0 %49
    %53 = vset.pattern.permute.xlu0 0
    %54 = vperm.xlu0 %53, %v40
    %v55 = vpop.permute.xlu0 %54
    %58 = vset.pattern.permute.xlu0 0
    %59 = vperm.xlu0 %58, %v41
    %v60 = vpop.permute.xlu0 %59
    %vm62 = vcmask 64512
    %v64 = vsel %vm62, %v33, 0
    %v67 = vsel %vm62, %v34, 0
    %v70 = vsel %vm62, %v35, 0
    %v73 = vsel %vm62, %v36, 0
    %75 = vmatpush.msra.mxu0 0.0
    %76 = vmatpush.msra.mxu0 0.0
    %77 = vmatpush.msra.mxu0 0.0
    %78 = vmatpush.msra.mxu0 0.0
    %79 = vmatpush.msra.mxu0 0.0
    %80 = vmatpush.msra.mxu0 0.0
    %81 = vmatpush.msra.mxu0 0.0
    %82 = vmatpush.msra.mxu0 0.0
    %83 = vmatpush.msra.mxu0 0.0
    %84 = vmatpush.msra.mxu0 0.0
    %85 = vmatpush.msra.mxu0 0.0
    %86 = vmatpush.msra.mxu0 0.0
    %87 = vmatpush.msra.mxu0 0.0
    %88 = vmatpush.msra.mxu0 0.0
    %89 = vmatpush.msra.mxu0 0.0
    %90 = vmatpush.msra.mxu0 %v37
    %91 = vmatmul.f32.gmra.mxu0 %v64
    %v92 = vpop.f32.mrf.mxu0
    %v93 = vadd.f32 %v45, %v92
    %94 = vmatmul.f32.gmra.mxu0 %v67
    %v95 = vpop.f32.mrf.mxu0
    %v96 = vadd.f32 %v50, %v95
    %97 = vmatmul.f32.gmra.mxu0 %v70
    %v98 = vpop.f32.mrf.mxu0
    %v99 = vadd.f32 %v55, %v98
    %100 = vmatmul.f32.gmra.mxu0 %v73
    %v101 = vpop.f32.mrf.mxu0
    %v102 = vadd.f32 %v60, %v101
    %103 = vdwg.mxu0
    %v104 = vmax.f32 %v93, 0.0
    %v105 = vmax.f32 %v96, 0.0
    %v106 = vmax.f32 %v99, 0.0
    %v107 = vmax.f32 %v102, 0.0
    %v108 = vld [vmem:[%s3] sm:$0xff]
    %v109 = vld [vmem:[%s3 + $0x8] sm:$0xff]
    %v110 = vld [vmem:[%s4] sm:$0xff]
    %v111 = vld [vmem:[%s4 + $0x8] sm:$0xff]
    %113 = vset.pattern.permute.xlu0 0
    %114 = vperm.xlu0 %113, %v110
    %v115 = vpop.permute.xlu0 %114
    %118 = vset.pattern.permute.xlu0 0
    %119 = vperm.xlu0 %118, %v111
    %v120 = vpop.permute.xlu0 %119
    %vm122 = vcmask 261120
    %v124 = vsel %vm122, %v108, 0
    %v127 = vsel %vm122, %v109, 0
    %129 = vmatpush.msra.mxu0 0.0
    %130 = vmatpush.msra.mxu0 0.0
    %131 = vmatpush.msra.mxu0 0.0
    %132 = vmatpush.msra.mxu0 0.0
    %133 = vmatpush.msra.mxu0 0.0
    %134 = vmatpush.msra.mxu0 0.0
    %135 = vmatpush.msra.mxu0 0.0
    %136 = vmatpush.msra.mxu0 0.0
    %137 = vmatpush.msra.mxu0 0.0
    %138 = vmatpush.msra.mxu0 0.0
    %139 = vmatpush.msra.mxu0 0.0
    %140 = vmatpush.msra.mxu0 0.0
    %141 = vmatpush.msra.mxu0 %v107
    %142 = vmatpush.msra.mxu0 %v106
    %143 = vmatpush.msra.mxu0 %v105
    %144 = vmatpush.msra.mxu0 %v104
    %145 = vmatmul.f32.gmra.mxu0 %v124
    %v146 = vpop.f32.mrf.mxu0
    %v147 = vadd.f32 %v115, %v146
    %148 = vmatmul.f32.gmra.mxu0 %v127
    %v149 = vpop.f32.mrf.mxu0
    %v150 = vadd.f32 %v120, %v149
    %151 = vdwg.mxu0
    %v152 = vmax.f32 %v147, 0.0
    %v153 = vmax.f32 %v150, 0.0
    %v154 = vld [vmem:[%s5] sm:$0xff]
    %v155 = vld [vmem:[%s6] sm:$0xff]
    %157 = vset.pattern.permute.xlu0 0
    %158 = vperm.xlu0 %157, %v155
    %v159 = vpop.permute.xlu0 %158
    %vm161 = vcmask 130048
    %v163 = vsel %vm161, %v154, 0
    %165 = vmatpush.msra.mxu0 0.0
    %166 = vmatpush.msra.mxu0 0.0
    %167 = vmatpush.msra.mxu0 0.0
    %168 = vmatpush.msra.mxu0 0.0
    %169 = vmatpush.msra.mxu0 0.0
    %170 = vmatpush.msra.mxu0 0.0
    %171 = vmatpush.msra.mxu0 0.0
    %172 = vmatpush.msra.mxu0 0.0
    %173 = vmatpush.msra.mxu0 0.0
    %174 = vmatpush.msra.mxu0 0.0
    %175 = vmatpush.msra.mxu0 0.0
    %176 = vmatpush.msra.mxu0 0.0
    %177 = vmatpush.msra.mxu0 0.0
    %178 = vmatpush.msra.mxu0 0.0
    %179 = vmatpush.msra.mxu0 %v153
    %180 = vmatpush.msra.mxu0 %v152
    %181 = vmatmul.f32.gmra.mxu0 %v163
    %v182 = vpop.f32.mrf.mxu0
    %v183 = vadd.f32 %v159, %v182
    %184 = vdwg.mxu0
    %v185 = vmax.f32 %v183, 0.0
    %v186 = vld [vmem:[%s7] sm:$0xf]
    %v187 = vld [vmem:[%s8] sm:$0xf]
    %189 = vset.pattern.permute.xlu0 0
    %190 = vperm.xlu0 %189, %v187
    %v191 = vpop.permute.xlu0 %190
    %v194 = vsel %vm62, %v186, 0
    %196 = vmatpush.msra.mxu0 0.0
    %197 = vmatpush.msra.mxu0 0.0
    %198 = vmatpush.msra.mxu0 0.0
    %199 = vmatpush.msra.mxu0 0.0
    %200 = vmatpush.msra.mxu0 0.0
    %201 = vmatpush.msra.mxu0 0.0
    %202 = vmatpush.msra.mxu0 0.0
    %203 = vmatpush.msra.mxu0 0.0
    %204 = vmatpush.msra.mxu0 0.0
    %205 = vmatpush.msra.mxu0 0.0
    %206 = vmatpush.msra.mxu0 0.0
    %207 = vmatpush.msra.mxu0 0.0
    %208 = vmatpush.msra.mxu0 0.0
    %209 = vmatpush.msra.mxu0 0.0
    %210 = vmatpush.msra.mxu0 0.0
    %211 = vmatpush.msra.mxu0 %v185
    %212 = vmatmul.f32.gmra.mxu0 %v194
    %v213 = vpop.f32.mrf.mxu0
    %v214 = vadd.f32 %v191, %v213
    %215 = vdwg.mxu0
    %vm216 = vcmask 60416
    %217 = vst.msk [vmem:[#allocation2] sm:$0xf] %vm216, %v214
    // Predicated region
    $region38: #{tpu_custom_call.1} parent=1 // pred_check
      _
    $region39: #{tpu_custom_call.1} parent=1 // pred_check_branch
      %219 = sbr.rel (0) target = $region41
    $region40: #{tpu_custom_call.1} parent=1 // pred_region
      %221 = vsyncadd [#allocation3], 0
      %s223 = sshll.u32 [#allocation2], 4
      %s224 = int_to_ptr.vmem [resolvable:$true] %s223
      %s225 = sshll.u32 %s9, 4
      %s226 = int_to_ptr.hbm [resolvable:$true] %s225
      %228 = dma.vmem_to_hbm [thread:$0]  %s224, 64, %s226, [#allocation3]
    $region41: #{tpu_custom_call.1} parent=1 // pred_fallthru
      _
    // Predicated region
    $region42: #{tpu_custom_call.1} parent=1 // pred_check
      _
    $region43: #{tpu_custom_call.1} parent=1 // pred_check_branch
      %230 = sbr.rel (0) target = $region45
    $region44: #{tpu_custom_call.1} parent=1 // pred_region
      %232 = dma.done [#allocation3], 64
    $region45: #{tpu_custom_call.1} parent=1 // pred_fallthru
      _
    %233 = vsyncpa [#allocation3], 1

</llo_original>
